<compile_context>
chip_gen: v7x
topology: tpu7x:2x2x1
jax: 0.10.0
libtpu: 0.0.40
codegen_flags: <defaults>
</compile_context>

<pallas_src>
import jax
import jax.numpy as jnp
from jax.experimental import pallas as pl
from jax.experimental.pallas import tpu as pltpu


_LANE = 128            # lane width: feature dims padded to a multiple of this
_SUBLANE = 16          # sublane multiple for bf16 activation tiles
_TARGET_TILE_B = 512   # target batch-tile rows (amortizes per-step overhead)
_SLACK = 2 << 20       # VMEM headroom for Mosaic internal scratch
_NEG_INF_BIAS = -1e30  # bias padding for softmax layers (exp underflows to 0)


def _round_up(n, m):
    return ((n + m - 1) // m) * m


def _cdiv(a, b):
    return -(-a // b)


# --------------------------------------------------------------------------
# in-kernel building blocks
# --------------------------------------------------------------------------
def _linear_block(h, w, b):
    # bf16 x bf16 on the MXU, f32 accumulation, f32 bias add.
    return jnp.dot(h, w, preferred_element_type=jnp.float32) + b


def _relu_block(z):
    return jnp.maximum(z, 0.0).astype(jnp.bfloat16)


def _softmax_block(z):
    # Numerically stable softmax over the lane dim.  Padded logit lanes carry
    # a -1e30 bias so exp() is exactly 0 there.  exp runs in bf16 (2x EUP rate
    # on v6e/v7x); sum + normalization stay in f32 with an exact divide (off
    # the MXU critical path) to limit compounded error across the cascade.
    m = jnp.max(z, axis=-1, keepdims=True)
    e = jnp.exp((z - m).astype(jnp.bfloat16))
    s = jnp.sum(e.astype(jnp.float32), axis=-1, keepdims=True)
    return (e.astype(jnp.float32) * (1.0 / s)).astype(jnp.bfloat16)


def _make_kernel(num_rest, n_split, tile_b):
    """Builds the cascade kernel for one batch tile.

    Args (refs): x [tile_b, F_in_p] bf16,
                 w0/b0, w1/b1 (first MLP), [ws, bs] (stacked remaining MLPs),
                 wf/bf (final linear), out [tile_b, H_p] f32.
    The batch tile is optionally split into 2 independent sub-blocks so one
    sub-block's softmax (EUP/XLU) overlaps the other's matmul (MXU).
    """
    half = tile_b // 2

    def kernel(x_ref, w0_ref, b0_ref, w1_ref, b1_ref, *rest):
        if num_rest:
            ws_ref, bs_ref, wf_ref, bf_ref, out_ref = rest
        else:
            wf_ref, bf_ref, out_ref = rest

        if n_split == 2:
            xs = (x_ref[:half, :], x_ref[half:, :])
        else:
            xs = (x_ref[...],)

        # ---- first MLP: Linear -> ReLU, Linear -> Softmax -----------------
        w0, b0 = w0_ref[...], b0_ref[...]
        hs = tuple(_relu_block(_linear_block(xb, w0, b0)) for xb in xs)
        w1, b1 = w1_ref[...], b1_ref[...]
        hs = tuple(_softmax_block(_linear_block(h, w1, b1)) for h in hs)

        # ---- remaining num_experts-1 MLPs (stacked weights) ---------------
        if num_rest:
            def one_mlp(m, hs):
                wr, br = ws_ref[2 * m], bs_ref[2 * m]
                wsm, bsm = ws_ref[2 * m + 1], bs_ref[2 * m + 1]
                hs = tuple(_relu_block(_linear_block(h, wr, br)) for h in hs)
                hs = tuple(_softmax_block(_linear_block(h, wsm, bsm))
                           for h in hs)
                return hs

            if num_rest <= 4:
                # short fixed trip-count: keep it visible to the scheduler
                for m in range(num_rest):
                    hs = one_mlp(m, hs)
            else:
                # deep cascades: bound live ranges / code size with a loop
                hs = jax.lax.fori_loop(0, num_rest, one_mlp, hs)

        # ---- final nn.Linear(output_size, output_size) --------------------
        wf, bf = wf_ref[...], bf_ref[...]
        ys = tuple(_linear_block(h, wf, bf) for h in hs)
        if n_split == 2:
            out_ref[:half, :] = ys[0].astype(out_ref.dtype)
            out_ref[half:, :] = ys[1].astype(out_ref.dtype)
        else:
            out_ref[...] = ys[0].astype(out_ref.dtype)

    return kernel


# --------------------------------------------------------------------------
# parameter preparation (one-time pad / cast / stack)
# --------------------------------------------------------------------------
def _pad_w(w, fi_p, fo_p):
    fi, fo = w.shape
    return jnp.zeros((fi_p, fo_p), jnp.bfloat16).at[:fi, :fo].set(
        w.astype(jnp.bfloat16))


def _pad_b(b, fo_p, pad_val):
    fo = b.shape[-1]
    return jnp.full((1, fo_p), pad_val, jnp.float32).at[:, :fo].set(
        b.reshape(1, -1).astype(jnp.float32))


def prepare_cascaded_params(params):
    """params: list of (w [in,out], b [1,out]) f32 for every linear, in order.

    Returns a dict of padded/stacked device arrays, built once (do NOT call
    per forward step)."""
    n_lin = len(params)
    num_experts = (n_lin - 1) // 2
    assert n_lin == 2 * num_experts + 1
    input_size, hidden_size = params[0][0].shape
    output_size = params[-1][0].shape[1]

    f_in_p = _round_up(input_size, _LANE)
    h_p = _round_up(max(hidden_size, output_size), _LANE)

    prepared = {
        # first MLP
        "w0": _pad_w(params[0][0], f_in_p, h_p),
        "b0": _pad_b(params[0][1], h_p, 0.0),
        "w1": _pad_w(params[1][0], h_p, h_p),
        "b1": _pad_b(params[1][1], h_p, _NEG_INF_BIAS),
        # final linear
        "wf": _pad_w(params[-1][0], h_p, h_p),
        "bf": _pad_b(params[-1][1], h_p, 0.0),
        "ws": None, "bs": None,
        "num_experts": num_experts,
        "input_size": int(input_size),
        "output_size": int(output_size),
        "f_in_p": f_in_p,
        "h_p": h_p,
    }
    rest = params[2:-1]                     # remaining MLPs: (relu, softmax)*
    if rest:
        prepared["ws"] = jnp.stack([_pad_w(w, h_p, h_p) for (w, _) in rest])
        prepared["bs"] = jnp.stack(
            [_pad_b(b, h_p, 0.0 if (j % 2 == 0) else _NEG_INF_BIAS)
             for j, (_, b) in enumerate(rest)])
    return prepared


# --------------------------------------------------------------------------
# host-side helpers
# --------------------------------------------------------------------------
def _vmem_cap_bytes():
    """~85% of the chip's VMEM (128 MiB on v5e/v6e, 64 MiB per TC on v7x)."""
    try:
        cap = int(pltpu.get_tpu_info().vmem_capacity_bytes)
    except Exception:
        cap = 64 << 20  # conservative fallback (v7x per-TC size)
    return max(32 << 20, int(cap * 0.85))


def _supports_single_buffered_weights():
    """Explicit capability check for pipeline_mode=pl.Buffered(1)."""
    if not hasattr(pl, "Buffered"):
        return False
    try:
        pl.BlockSpec((8, 128), lambda i: (0, 0), pipeline_mode=pl.Buffered(1))
        return True
    except TypeError:
        return False


# --------------------------------------------------------------------------
# forward
# --------------------------------------------------------------------------
def cascaded_experts_forward(x, prepared, *, tile_b=None):
    B, F_in = x.shape
    assert F_in == prepared["input_size"]
    F_in_p, H_p = prepared["f_in_p"], prepared["h_p"]
    E = prepared["num_experts"]
    out_size = prepared["output_size"]
    num_rest = E - 1

    flat = [prepared["w0"], prepared["b0"], prepared["w1"], prepared["b1"]]
    if num_rest:
        flat += [prepared["ws"], prepared["bs"]]
    flat += [prepared["wf"], prepared["bf"]]
    weight_bytes = sum(int(a.size) * a.dtype.itemsize for a in flat)

    cap = _vmem_cap_bytes()
    use_single = _supports_single_buffered_weights()
    wmult = 1 if use_single else 2

    # ---- batch tiling: big tiles amortize per-grid-step overhead and MXU
    # weight pushes; choose tile so B_p carries minimal padded rows.
    # TODO(synk): on 2-TC chips (v7x) prefer >=2 grid steps so the "parallel"
    # batch axis can shard across both TensorCores.
    if tile_b is None:
        if B >= 64:
            n_tiles = max(1, _cdiv(B, _TARGET_TILE_B))
            tile_b = _round_up(_cdiv(B, n_tiles), 32)
        else:
            tile_b = _round_up(max(B, 1), _SUBLANE)
    tile_b = _round_up(tile_b, _SUBLANE)

    def _tile_bytes(tb):
        io = 2 * tb * F_in_p * 2 + 2 * tb * H_p * 4   # double-buffered I/O
        act = 8 * tb * max(F_in_p, H_p) * 4           # working activations
        return io + act

    while tile_b > 32 and (wmult * weight_bytes + _tile_bytes(tile_b)
                           + _SLACK) > cap:
        tile_b = _round_up(tile_b // 2, _SUBLANE)

    B_p = _round_up(B, tile_b)
    n_split = 2 if (tile_b >= 64 and tile_b % 32 == 0) else 1

    x_p = jnp.zeros((B_p, F_in_p), jnp.bfloat16).at[:B, :F_in].set(
        x.astype(jnp.bfloat16))

    cost = pl.CostEstimate(
        flops=int(2 * B_p * (F_in_p * H_p + 2 * E * H_p * H_p)),
        transcendentals=int(B_p * E * H_p),
        bytes_accessed=int(weight_bytes + B_p * F_in_p * 2 + B_p * H_p * 4))

    kernel = _make_kernel(num_rest, n_split, tile_b)

    def _in_specs(weight_kw):
        specs = [pl.BlockSpec((tile_b, F_in_p), lambda i: (i, 0))]
        for a in flat:
            if a.ndim == 2:
                specs.append(pl.BlockSpec(a.shape, lambda i: (0, 0),
                                          **weight_kw))
            else:
                specs.append(pl.BlockSpec(a.shape, lambda i: (0, 0, 0),
                                          **weight_kw))
        return specs

    def _run(single):
        kw = {"pipeline_mode": pl.Buffered(1)} if single else {}
        wm = 1 if single else 2
        need = wm * weight_bytes + _tile_bytes(tile_b) + _SLACK
        vmem_limit = int(min(cap, max(need, 16 << 20)))
        return pl.pallas_call(
            kernel,
            out_shape=jax.ShapeDtypeStruct((B_p, H_p), jnp.float32),
            grid=(B_p // tile_b,),
            in_specs=_in_specs(kw),
            out_specs=pl.BlockSpec((tile_b, H_p), lambda i: (i, 0)),
            compiler_params=pltpu.CompilerParams(
                dimension_semantics=("parallel",),
                vmem_limit_bytes=vmem_limit),
            cost_estimate=cost,
        )(x_p, *flat)

    if use_single:
        try:
            out_p = _run(True)
        except (TypeError, NotImplementedError, ValueError,
                pltpu.LoweringException):
            # pipeline_mode accepted at construction but rejected by lowering;
            # fall back to default double-buffered weights with a budget that
            # matches that scheme (genuine OOM/compile errors still surface on
            # the fallback run).
            out_p = _run(False)
    else:
        out_p = _run(False)

    out = out_p[:B, :out_size].astype(x.dtype)
    return out, 0


# --------------------------------------------------------------------------
# init + pure-JAX reference
# --------------------------------------------------------------------------
def _linear_params(key, fan_in, fan_out):
    """PyTorch nn.Linear default init: U(-1/sqrt(fan_in), 1/sqrt(fan_in))."""
    kw, kb = jax.random.split(key)
    bound = 1.0 / float(jnp.sqrt(jnp.float32(fan_in)))
    w = jax.random.uniform(kw, (fan_in, fan_out), jnp.float32, -bound, bound)
    b = jax.random.uniform(kb, (1, fan_out), jnp.float32, -bound, bound)
    return w, b


def init_cascaded_experts(key, input_size, output_size, num_experts,
                          hidden_size):
    # The PyTorch cascade only composes when hidden_size == output_size
    # (except the trivial num_experts == 2 case).
    assert num_experts == 2 or hidden_size == output_size, (
        "CascadedExperts cascade requires hidden_size == output_size")
    params = []
    # first MLP: MLP(input_size, hidden_size, hidden_size)
    key, k1, k2 = jax.random.split(key, 3)
    params.append(_linear_params(k1, input_size, hidden_size))
    params.append(_linear_params(k2, hidden_size, hidden_size))
    # remaining num_experts-1 MLPs: MLP(hidden_size, output_size, hidden_size)
    for _ in range(num_experts - 1):
        key, k1, k2 = jax.random.split(key, 3)
        params.append(_linear_params(k1, hidden_size, hidden_size))
        params.append(_linear_params(k2, hidden_size, output_size))
    # final nn.Linear(output_size, output_size)
    key, kf = jax.random.split(key)
    params.append(_linear_params(kf, output_size, output_size))
    return params


def reference_forward(x, params):
    """Pure-JAX (f32) reference of the intended PyTorch semantics."""
    h = x
    n_mlps = (len(params) - 1) // 2
    idx = 0
    for _ in range(n_mlps):
        w1, b1 = params[idx]
        w2, b2 = params[idx + 1]
        idx += 2
        h = jax.nn.relu(h @ w1 + b1)
        h = jax.nn.softmax(h @ w2 + b2, axis=-1)
    wf, bf = params[idx]
    return h @ wf + bf, 0


# --------------------------------------------------------------------------
if __name__ == "__main__":
    key = jax.random.PRNGKey(0)

    def _check(batch, input_size, hidden_size, output_size, num_experts, k):
        k, kx, kp = jax.random.split(k, 3)
        x = jax.random.normal(kx, (batch, input_size), jnp.float32)
        params = init_cascaded_experts(kp, input_size, output_size,
                                       num_experts, hidden_size)
        prepared = prepare_cascaded_params(params)   # one-time pad/cast/stack
        out, zero = cascaded_experts_forward(x, prepared)
        out = jax.block_until_ready(out)
        ref, _ = reference_forward(x, params)
        assert out.shape == (batch, output_size)
        assert zero == 0
        # bf16 MXU operands / bf16 exp -> relax the pure-f32 tolerance.
        assert jnp.allclose(out, ref, atol=2e-2, rtol=2e-2), \
            "mismatch vs reference"
        return k

    # small shapes consistent with the module (hidden == output so the MLP
    # cascade composes, as the module's construction implies)
    key = _check(batch=8, input_size=16, hidden_size=32, output_size=32,
                 num_experts=3, k=key)
    # slightly larger config exercising the split-tile path
    key = _check(batch=96, input_size=48, hidden_size=64, output_size=64,
                 num_experts=4, k=key)

    print("KERNEL_OK")
</pallas_src>

<mosaic_0001>
module attributes {stable_mosaic.version = 11 : i64} {
  func.func @kernel(%arg0: i32, %arg1: memref<16x128xbf16, #tpu.memory_space<vmem>>, %arg2: memref<128x128xbf16, #tpu.memory_space<vmem>>, %arg3: memref<1x128xf32, #tpu.memory_space<vmem>>, %arg4: memref<128x128xbf16, #tpu.memory_space<vmem>>, %arg5: memref<1x128xf32, #tpu.memory_space<vmem>>, %arg6: memref<4x128x128xbf16, #tpu.memory_space<vmem>>, %arg7: memref<4x1x128xf32, #tpu.memory_space<vmem>>, %arg8: memref<128x128xbf16, #tpu.memory_space<vmem>>, %arg9: memref<1x128xf32, #tpu.memory_space<vmem>>, %arg10: memref<16x128xf32, #tpu.memory_space<vmem>>) attributes {dimension_semantics = [#tpu.dimension_semantics<parallel>], iteration_bounds = array<i64: 1>, scalar_prefetch = 0 : i64, scratch_operands = 0 : i64, tpu.core_type = #tpu.core_type<tc>, window_params = [{transform_indices = @transform_0, window_bounds = array<i64: 16, 128>}, {pipeline_mode = #tpu.pipeline_mode<synchronous>, transform_indices = @transform_1, window_bounds = array<i64: 128, 128>}, {pipeline_mode = #tpu.pipeline_mode<synchronous>, transform_indices = @transform_2, window_bounds = array<i64: 1, 128>}, {pipeline_mode = #tpu.pipeline_mode<synchronous>, transform_indices = @transform_3, window_bounds = array<i64: 128, 128>}, {pipeline_mode = #tpu.pipeline_mode<synchronous>, transform_indices = @transform_4, window_bounds = array<i64: 1, 128>}, {pipeline_mode = #tpu.pipeline_mode<synchronous>, transform_indices = @transform_5, window_bounds = array<i64: 4, 128, 128>}, {pipeline_mode = #tpu.pipeline_mode<synchronous>, transform_indices = @transform_6, window_bounds = array<i64: 4, 1, 128>}, {pipeline_mode = #tpu.pipeline_mode<synchronous>, transform_indices = @transform_7, window_bounds = array<i64: 128, 128>}, {pipeline_mode = #tpu.pipeline_mode<synchronous>, transform_indices = @transform_8, window_bounds = array<i64: 1, 128>}, {transform_indices = @transform_9, window_bounds = array<i64: 16, 128>}]} {
    %c0 = arith.constant 0 : index
    %c0_0 = arith.constant 0 : index
    %0 = vector.load %arg1[%c0, %c0_0] : memref<16x128xbf16, #tpu.memory_space<vmem>>, vector<16x128xbf16>
    %c0_1 = arith.constant 0 : index
    %c0_2 = arith.constant 0 : index
    %1 = vector.load %arg2[%c0_1, %c0_2] : memref<128x128xbf16, #tpu.memory_space<vmem>>, vector<128x128xbf16>
    %c0_3 = arith.constant 0 : index
    %c0_4 = arith.constant 0 : index
    %2 = vector.load %arg3[%c0_3, %c0_4] : memref<1x128xf32, #tpu.memory_space<vmem>>, vector<1x128xf32>
    %cst = arith.constant dense<0.000000e+00> : vector<16x128xf32>
    %3 = tpu.matmul %0, %1, %cst {dimension_numbers = #tpu.dot_dimension_numbers<[1], [0], [0], [1], [0, 0, 1, 1], [], []>} : vector<16x128xbf16>, vector<128x128xbf16>, vector<16x128xf32> -> vector<16x128xf32>
    %4 = vector.broadcast %2 : vector<1x128xf32> to vector<16x128xf32>
    %5 = arith.addf %3, %4 : vector<16x128xf32>
    %cst_5 = arith.constant 0.000000e+00 : f32
    %6 = vector.broadcast %cst_5 : f32 to vector<16x128xf32>
    %7 = arith.maximumf %5, %6 : vector<16x128xf32>
    %8 = arith.truncf %7 : vector<16x128xf32> to vector<16x128xbf16>
    %c0_6 = arith.constant 0 : index
    %c0_7 = arith.constant 0 : index
    %9 = vector.load %arg4[%c0_6, %c0_7] : memref<128x128xbf16, #tpu.memory_space<vmem>>, vector<128x128xbf16>
    %c0_8 = arith.constant 0 : index
    %c0_9 = arith.constant 0 : index
    %10 = vector.load %arg5[%c0_8, %c0_9] : memref<1x128xf32, #tpu.memory_space<vmem>>, vector<1x128xf32>
    %cst_10 = arith.constant dense<0.000000e+00> : vector<16x128xf32>
    %11 = tpu.matmul %8, %9, %cst_10 {dimension_numbers = #tpu.dot_dimension_numbers<[1], [0], [0], [1], [0, 0, 1, 1], [], []>} : vector<16x128xbf16>, vector<128x128xbf16>, vector<16x128xf32> -> vector<16x128xf32>
    %12 = vector.broadcast %10 : vector<1x128xf32> to vector<16x128xf32>
    %13 = arith.addf %11, %12 : vector<16x128xf32>
    %cst_11 = arith.constant dense<0xFF800000> : vector<16xf32>
    %14 = vector.multi_reduction <maximumf>, %13, %cst_11 [1] : vector<16x128xf32> to vector<16xf32>
    %15 = vector.shape_cast %14 : vector<16xf32> to vector<16x1xf32>
    %16 = vector.broadcast %15 : vector<16x1xf32> to vector<16x128xf32>
    %17 = arith.subf %13, %16 : vector<16x128xf32>
    %18 = arith.truncf %17 : vector<16x128xf32> to vector<16x128xbf16>
    %19 = math.exp %18 : vector<16x128xbf16>
    %20 = arith.extf %19 : vector<16x128xbf16> to vector<16x128xf32>
    %cst_12 = arith.constant dense<0.000000e+00> : vector<16xf32>
    %21 = vector.multi_reduction <add>, %20, %cst_12 [1] : vector<16x128xf32> to vector<16xf32>
    %22 = vector.shape_cast %21 : vector<16xf32> to vector<16x1xf32>
    %23 = arith.extf %19 : vector<16x128xbf16> to vector<16x128xf32>
    %cst_13 = arith.constant 1.000000e+00 : f32
    %24 = vector.broadcast %cst_13 : f32 to vector<16x1xf32>
    %25 = arith.divf %24, %22 : vector<16x1xf32>
    %26 = vector.broadcast %25 : vector<16x1xf32> to vector<16x128xf32>
    %27 = arith.mulf %23, %26 : vector<16x128xf32>
    %28 = arith.truncf %27 : vector<16x128xf32> to vector<16x128xbf16>
    %c0_14 = arith.constant 0 : index
    %c0_15 = arith.constant 0 : index
    %c0_16 = arith.constant 0 : index
    %29 = vector.load %arg6[%c0_14, %c0_15, %c0_16] : memref<4x128x128xbf16, #tpu.memory_space<vmem>>, vector<1x128x128xbf16>
    %30 = vector.shape_cast %29 : vector<1x128x128xbf16> to vector<128x128xbf16>
    %c0_17 = arith.constant 0 : index
    %c0_18 = arith.constant 0 : index
    %c0_19 = arith.constant 0 : index
    %31 = vector.load %arg7[%c0_17, %c0_18, %c0_19] : memref<4x1x128xf32, #tpu.memory_space<vmem>>, vector<1x1x128xf32>
    %32 = vector.shape_cast %31 : vector<1x1x128xf32> to vector<1x128xf32>
    %c1 = arith.constant 1 : index
    %c0_20 = arith.constant 0 : index
    %c0_21 = arith.constant 0 : index
    %33 = vector.load %arg6[%c1, %c0_20, %c0_21] : memref<4x128x128xbf16, #tpu.memory_space<vmem>>, vector<1x128x128xbf16>
    %34 = vector.shape_cast %33 : vector<1x128x128xbf16> to vector<128x128xbf16>
    %c1_22 = arith.constant 1 : index
    %c0_23 = arith.constant 0 : index
    %c0_24 = arith.constant 0 : index
    %35 = vector.load %arg7[%c1_22, %c0_23, %c0_24] : memref<4x1x128xf32, #tpu.memory_space<vmem>>, vector<1x1x128xf32>
    %36 = vector.shape_cast %35 : vector<1x1x128xf32> to vector<1x128xf32>
    %cst_25 = arith.constant dense<0.000000e+00> : vector<16x128xf32>
    %37 = tpu.matmul %28, %30, %cst_25 {dimension_numbers = #tpu.dot_dimension_numbers<[1], [0], [0], [1], [0, 0, 1, 1], [], []>} : vector<16x128xbf16>, vector<128x128xbf16>, vector<16x128xf32> -> vector<16x128xf32>
    %38 = vector.broadcast %32 : vector<1x128xf32> to vector<16x128xf32>
    %39 = arith.addf %37, %38 : vector<16x128xf32>
    %cst_26 = arith.constant 0.000000e+00 : f32
    %40 = vector.broadcast %cst_26 : f32 to vector<16x128xf32>
    %41 = arith.maximumf %39, %40 : vector<16x128xf32>
    %42 = arith.truncf %41 : vector<16x128xf32> to vector<16x128xbf16>
    %cst_27 = arith.constant dense<0.000000e+00> : vector<16x128xf32>
    %43 = tpu.matmul %42, %34, %cst_27 {dimension_numbers = #tpu.dot_dimension_numbers<[1], [0], [0], [1], [0, 0, 1, 1], [], []>} : vector<16x128xbf16>, vector<128x128xbf16>, vector<16x128xf32> -> vector<16x128xf32>
    %44 = vector.broadcast %36 : vector<1x128xf32> to vector<16x128xf32>
    %45 = arith.addf %43, %44 : vector<16x128xf32>
    %cst_28 = arith.constant dense<0xFF800000> : vector<16xf32>
    %46 = vector.multi_reduction <maximumf>, %45, %cst_28 [1] : vector<16x128xf32> to vector<16xf32>
    %47 = vector.shape_cast %46 : vector<16xf32> to vector<16x1xf32>
    %48 = vector.broadcast %47 : vector<16x1xf32> to vector<16x128xf32>
    %49 = arith.subf %45, %48 : vector<16x128xf32>
    %50 = arith.truncf %49 : vector<16x128xf32> to vector<16x128xbf16>
    %51 = math.exp %50 : vector<16x128xbf16>
    %52 = arith.extf %51 : vector<16x128xbf16> to vector<16x128xf32>
    %cst_29 = arith.constant dense<0.000000e+00> : vector<16xf32>
    %53 = vector.multi_reduction <add>, %52, %cst_29 [1] : vector<16x128xf32> to vector<16xf32>
    %54 = vector.shape_cast %53 : vector<16xf32> to vector<16x1xf32>
    %55 = arith.extf %51 : vector<16x128xbf16> to vector<16x128xf32>
    %cst_30 = arith.constant 1.000000e+00 : f32
    %56 = vector.broadcast %cst_30 : f32 to vector<16x1xf32>
    %57 = arith.divf %56, %54 : vector<16x1xf32>
    %58 = vector.broadcast %57 : vector<16x1xf32> to vector<16x128xf32>
    %59 = arith.mulf %55, %58 : vector<16x128xf32>
    %60 = arith.truncf %59 : vector<16x128xf32> to vector<16x128xbf16>
    %c2 = arith.constant 2 : index
    %c0_31 = arith.constant 0 : index
    %c0_32 = arith.constant 0 : index
    %61 = vector.load %arg6[%c2, %c0_31, %c0_32] : memref<4x128x128xbf16, #tpu.memory_space<vmem>>, vector<1x128x128xbf16>
    %62 = vector.shape_cast %61 : vector<1x128x128xbf16> to vector<128x128xbf16>
    %c2_33 = arith.constant 2 : index
    %c0_34 = arith.constant 0 : index
    %c0_35 = arith.constant 0 : index
    %63 = vector.load %arg7[%c2_33, %c0_34, %c0_35] : memref<4x1x128xf32, #tpu.memory_space<vmem>>, vector<1x1x128xf32>
    %64 = vector.shape_cast %63 : vector<1x1x128xf32> to vector<1x128xf32>
    %c3 = arith.constant 3 : index
    %c0_36 = arith.constant 0 : index
    %c0_37 = arith.constant 0 : index
    %65 = vector.load %arg6[%c3, %c0_36, %c0_37] : memref<4x128x128xbf16, #tpu.memory_space<vmem>>, vector<1x128x128xbf16>
    %66 = vector.shape_cast %65 : vector<1x128x128xbf16> to vector<128x128xbf16>
    %c3_38 = arith.constant 3 : index
    %c0_39 = arith.constant 0 : index
    %c0_40 = arith.constant 0 : index
    %67 = vector.load %arg7[%c3_38, %c0_39, %c0_40] : memref<4x1x128xf32, #tpu.memory_space<vmem>>, vector<1x1x128xf32>
    %68 = vector.shape_cast %67 : vector<1x1x128xf32> to vector<1x128xf32>
    %cst_41 = arith.constant dense<0.000000e+00> : vector<16x128xf32>
    %69 = tpu.matmul %60, %62, %cst_41 {dimension_numbers = #tpu.dot_dimension_numbers<[1], [0], [0], [1], [0, 0, 1, 1], [], []>} : vector<16x128xbf16>, vector<128x128xbf16>, vector<16x128xf32> -> vector<16x128xf32>
    %70 = vector.broadcast %64 : vector<1x128xf32> to vector<16x128xf32>
    %71 = arith.addf %69, %70 : vector<16x128xf32>
    %cst_42 = arith.constant 0.000000e+00 : f32
    %72 = vector.broadcast %cst_42 : f32 to vector<16x128xf32>
    %73 = arith.maximumf %71, %72 : vector<16x128xf32>
    %74 = arith.truncf %73 : vector<16x128xf32> to vector<16x128xbf16>
    %cst_43 = arith.constant dense<0.000000e+00> : vector<16x128xf32>
    %75 = tpu.matmul %74, %66, %cst_43 {dimension_numbers = #tpu.dot_dimension_numbers<[1], [0], [0], [1], [0, 0, 1, 1], [], []>} : vector<16x128xbf16>, vector<128x128xbf16>, vector<16x128xf32> -> vector<16x128xf32>
    %76 = vector.broadcast %68 : vector<1x128xf32> to vector<16x128xf32>
    %77 = arith.addf %75, %76 : vector<16x128xf32>
    %cst_44 = arith.constant dense<0xFF800000> : vector<16xf32>
    %78 = vector.multi_reduction <maximumf>, %77, %cst_44 [1] : vector<16x128xf32> to vector<16xf32>
    %79 = vector.shape_cast %78 : vector<16xf32> to vector<16x1xf32>
    %80 = vector.broadcast %79 : vector<16x1xf32> to vector<16x128xf32>
    %81 = arith.subf %77, %80 : vector<16x128xf32>
    %82 = arith.truncf %81 : vector<16x128xf32> to vector<16x128xbf16>
    %83 = math.exp %82 : vector<16x128xbf16>
    %84 = arith.extf %83 : vector<16x128xbf16> to vector<16x128xf32>
    %cst_45 = arith.constant dense<0.000000e+00> : vector<16xf32>
    %85 = vector.multi_reduction <add>, %84, %cst_45 [1] : vector<16x128xf32> to vector<16xf32>
    %86 = vector.shape_cast %85 : vector<16xf32> to vector<16x1xf32>
    %87 = arith.extf %83 : vector<16x128xbf16> to vector<16x128xf32>
    %cst_46 = arith.constant 1.000000e+00 : f32
    %88 = vector.broadcast %cst_46 : f32 to vector<16x1xf32>
    %89 = arith.divf %88, %86 : vector<16x1xf32>
    %90 = vector.broadcast %89 : vector<16x1xf32> to vector<16x128xf32>
    %91 = arith.mulf %87, %90 : vector<16x128xf32>
    %92 = arith.truncf %91 : vector<16x128xf32> to vector<16x128xbf16>
    %c0_47 = arith.constant 0 : index
    %c0_48 = arith.constant 0 : index
    %93 = vector.load %arg8[%c0_47, %c0_48] : memref<128x128xbf16, #tpu.memory_space<vmem>>, vector<128x128xbf16>
    %c0_49 = arith.constant 0 : index
    %c0_50 = arith.constant 0 : index
    %94 = vector.load %arg9[%c0_49, %c0_50] : memref<1x128xf32, #tpu.memory_space<vmem>>, vector<1x128xf32>
    %cst_51 = arith.constant dense<0.000000e+00> : vector<16x128xf32>
    %95 = tpu.matmul %92, %93, %cst_51 {dimension_numbers = #tpu.dot_dimension_numbers<[1], [0], [0], [1], [0, 0, 1, 1], [], []>} : vector<16x128xbf16>, vector<128x128xbf16>, vector<16x128xf32> -> vector<16x128xf32>
    %96 = vector.broadcast %94 : vector<1x128xf32> to vector<16x128xf32>
    %97 = arith.addf %95, %96 : vector<16x128xf32>
    %c0_52 = arith.constant 0 : index
    %c0_53 = arith.constant 0 : index
    %98 = vector.load %arg10[%c0_52, %c0_53] : memref<16x128xf32, #tpu.memory_space<vmem>>, vector<16x128xf32>
    tpu.vector_store %arg10[%c0_52, %c0_53], %97 {strides = array<i32>} : memref<16x128xf32, #tpu.memory_space<vmem>>, vector<16x128xf32>,
    return
  }
  func.func @transform_0(%arg0: i32) -> (i32, i32) {
    %c0_i32 = arith.constant 0 : i32
    %c0_i32_0 = arith.constant 0 : i32
    return %arg0, %c0_i32 : i32, i32
  }
  func.func @transform_1(%arg0: i32) -> (i32, i32) {
    %c0_i32 = arith.constant 0 : i32
    %c0_i32_0 = arith.constant 0 : i32
    %c0_i32_1 = arith.constant 0 : i32
    return %c0_i32, %c0_i32_0 : i32, i32
  }
  func.func @transform_2(%arg0: i32) -> (i32, i32) {
    %c0_i32 = arith.constant 0 : i32
    %c0_i32_0 = arith.constant 0 : i32
    %c0_i32_1 = arith.constant 0 : i32
    return %c0_i32, %c0_i32_0 : i32, i32
  }
  func.func @transform_3(%arg0: i32) -> (i32, i32) {
    %c0_i32 = arith.constant 0 : i32
    %c0_i32_0 = arith.constant 0 : i32
    %c0_i32_1 = arith.constant 0 : i32
    return %c0_i32, %c0_i32_0 : i32, i32
  }
  func.func @transform_4(%arg0: i32) -> (i32, i32) {
    %c0_i32 = arith.constant 0 : i32
    %c0_i32_0 = arith.constant 0 : i32
    %c0_i32_1 = arith.constant 0 : i32
    return %c0_i32, %c0_i32_0 : i32, i32
  }
  func.func @transform_5(%arg0: i32) -> (i32, i32, i32) {
    %c0_i32 = arith.constant 0 : i32
    %c0_i32_0 = arith.constant 0 : i32
    %c0_i32_1 = arith.constant 0 : i32
    %c0_i32_2 = arith.constant 0 : i32
    return %c0_i32, %c0_i32_0, %c0_i32_1 : i32, i32, i32
  }
  func.func @transform_6(%arg0: i32) -> (i32, i32, i32) {
    %c0_i32 = arith.constant 0 : i32
    %c0_i32_0 = arith.constant 0 : i32
    %c0_i32_1 = arith.constant 0 : i32
    %c0_i32_2 = arith.constant 0 : i32
    return %c0_i32, %c0_i32_0, %c0_i32_1 : i32, i32, i32
  }
  func.func @transform_7(%arg0: i32) -> (i32, i32) {
    %c0_i32 = arith.constant 0 : i32
    %c0_i32_0 = arith.constant 0 : i32
    %c0_i32_1 = arith.constant 0 : i32
    return %c0_i32, %c0_i32_0 : i32, i32
  }
  func.func @transform_8(%arg0: i32) -> (i32, i32) {
    %c0_i32 = arith.constant 0 : i32
    %c0_i32_0 = arith.constant 0 : i32
    %c0_i32_1 = arith.constant 0 : i32
    return %c0_i32, %c0_i32_0 : i32, i32
  }
  func.func @transform_9(%arg0: i32) -> (i32, i32) {
    %c0_i32 = arith.constant 0 : i32
    %c0_i32_0 = arith.constant 0 : i32
    return %arg0, %c0_i32 : i32, i32
  }
}

</mosaic_0001>

<llo_original>
// kernel: tpu_custom_call.1
$region0: #{tpu_custom_call.1}
  #allocation0 [shape = 'u32[]', space=smem, size = 0x4, offset = 0x4, fixed_abs, tag = 'smem constant byte address 0x4 - core index']
  #allocation1 [shape = 'u32[144,128]{1,0:T(1,128)}', space=vmem, size = 0x12000, scoped, tag = 'internal scratch']
  %s0 = inlined_call_operand.hbm [shape: bf16[16,128], index: 0, kind: input, shape index: {}]
  %s1 = inlined_call_operand.hbm [shape: bf16[128,128], index: 1, kind: input, shape index: {}]
  %s2 = inlined_call_operand.vmem [shape: f32[1,128], index: 2, kind: input, shape index: {}]
  %s3 = inlined_call_operand.hbm [shape: bf16[128,128], index: 3, kind: input, shape index: {}]
  %s4 = inlined_call_operand.vmem [shape: f32[1,128], index: 4, kind: input, shape index: {}]
  %s5 = inlined_call_operand.hbm [shape: bf16[4,128,128], index: 5, kind: input, shape index: {}]
  %s6 = inlined_call_operand.vmem [shape: f32[4,1,128], index: 6, kind: input, shape index: {}]
  %s7 = inlined_call_operand.hbm [shape: bf16[128,128], index: 7, kind: input, shape index: {}]
  %s8 = inlined_call_operand.vmem [shape: f32[1,128], index: 8, kind: input, shape index: {}]
  %s9 = inlined_call_operand.hbm [shape: f32[16,128], index: 9, kind: output, shape index: {}]
  %s10 = sld [smem:[#allocation0]]
  $region66: #{tpu_custom_call.1} parent=0
    _
  %s12 = ssub.s32 1, %s10
  %s13 = scalar_select 0, %s12, %s10
  $region1: #{tpu_custom_call.1} parent=0
    #allocation2 [shape = 'u8[4096]{0}', space=vmem, size = 0x1000, scoped, tag = 'input window, operand 0, single buffered']
    #allocation3 [shape = 's32[1]{0}', space=sflag, size = 0x4, scoped, tag = 'scoped memory for tpu_custom_call.1']
    #allocation4 [shape = 's32[1]{0}', space=sflag, size = 0x4, scoped, tag = 'scoped memory for tpu_custom_call.1']
    #allocation5 [shape = 'u8[32768]{0}', space=vmem, size = 0x8000, scoped, tag = 'input window, operand 1, single buffered']
    #allocation6 [shape = 's32[1]{0}', space=sflag, size = 0x4, scoped, tag = 'scoped memory for tpu_custom_call.1']
    #allocation7 [shape = 'u8[32768]{0}', space=vmem, size = 0x8000, scoped, tag = 'input window, operand 3, single buffered']
    #allocation8 [shape = 'u8[131072]{0}', space=vmem, size = 0x20000, scoped, tag = 'input window, operand 5, single buffered']
    #allocation9 [shape = 's32[1]{0}', space=sflag, size = 0x4, scoped, tag = 'scoped memory for tpu_custom_call.1']
    #allocation10 [shape = 'u8[32768]{0}', space=vmem, size = 0x8000, scoped, tag = 'input window, operand 7, single buffered']
    #allocation11 [shape = 'u8[8192]{0}', space=vmem, size = 0x2000, scoped, tag = 'output window, operand 0, single buffered']
    %14 = vsyncpa [#allocation3], 0
    %15 = vsyncpa [#allocation6], 0
    %16 = vsyncpa [#allocation9], 0
    %17 = vsyncpa [#allocation4], 0
    // Predicated region
    $region2: #{tpu_custom_call.1} parent=1 // pred_check
      _
    $region3: #{tpu_custom_call.1} parent=1 // pred_check_branch
      %19 = sbr.rel (0) target = $region5
    $region4: #{tpu_custom_call.1} parent=1 // pred_region
      %s21 = ssub.s32 128, 128
      %22 = vsyncadd [#allocation3], %s21
      %s23 = sshll.u32 [#allocation2], 4
      %s24 = int_to_ptr.vmem [resolvable:$true] %s23
      %29 = dma.hbm_to_vmem [thread:$0]  %s0, 128, %s24, [#allocation3], 64, 64, 4
    $region5: #{tpu_custom_call.1} parent=1 // pred_fallthru
      _
    // Predicated region
    $region6: #{tpu_custom_call.1} parent=1 // pred_check
      _
    $region7: #{tpu_custom_call.1} parent=1 // pred_check_branch
      %31 = sbr.rel (0) target = $region9
    $region8: #{tpu_custom_call.1} parent=1 // pred_region
      %s33 = ssub.s32 1024, 1024
      %34 = vsyncadd [#allocation6], %s33
      %s35 = sshll.u32 [#allocation5], 4
      %s36 = int_to_ptr.vmem [resolvable:$true] %s35
      %41 = dma.hbm_to_vmem [thread:$0]  %s1, 1024, %s36, [#allocation6], 64, 64, 4
    $region9: #{tpu_custom_call.1} parent=1 // pred_fallthru
      _
    // Predicated region
    $region10: #{tpu_custom_call.1} parent=1 // pred_check
      _
    $region11: #{tpu_custom_call.1} parent=1 // pred_check_branch
      %43 = sbr.rel (0) target = $region13
    $region12: #{tpu_custom_call.1} parent=1 // pred_region
      _
    $region13: #{tpu_custom_call.1} parent=1 // pred_fallthru
      _
    // Predicated region
    $region14: #{tpu_custom_call.1} parent=1 // pred_check
      _
    $region15: #{tpu_custom_call.1} parent=1 // pred_check_branch
      %45 = sbr.rel (0) target = $region17
    $region16: #{tpu_custom_call.1} parent=1 // pred_region
      %s47 = ssub.s32 1024, 1024
      %48 = vsyncadd [#allocation6], %s47
      %s49 = sshll.u32 [#allocation7], 4
      %s50 = int_to_ptr.vmem [resolvable:$true] %s49
      %55 = dma.hbm_to_vmem [thread:$0]  %s3, 1024, %s50, [#allocation6], 64, 64, 4
    $region17: #{tpu_custom_call.1} parent=1 // pred_fallthru
      _
    // Predicated region
    $region18: #{tpu_custom_call.1} parent=1 // pred_check
      _
    $region19: #{tpu_custom_call.1} parent=1 // pred_check_branch
      %57 = sbr.rel (0) target = $region21
    $region20: #{tpu_custom_call.1} parent=1 // pred_region
      _
    $region21: #{tpu_custom_call.1} parent=1 // pred_fallthru
      _
    // Predicated region
    $region22: #{tpu_custom_call.1} parent=1 // pred_check
      _
    $region23: #{tpu_custom_call.1} parent=1 // pred_check_branch
      %59 = sbr.rel (0) target = $region25
    $region24: #{tpu_custom_call.1} parent=1 // pred_region
      %s61 = ssub.s32 4096, 4096
      %62 = vsyncadd [#allocation9], %s61
      %s63 = sshll.u32 [#allocation8], 4
      %s64 = int_to_ptr.vmem [resolvable:$true] %s63
      %69 = dma.hbm_to_vmem [thread:$0]  %s5, 4096, %s64, [#allocation9], 64, 64, 4
    $region25: #{tpu_custom_call.1} parent=1 // pred_fallthru
      _
    // Predicated region
    $region26: #{tpu_custom_call.1} parent=1 // pred_check
      _
    $region27: #{tpu_custom_call.1} parent=1 // pred_check_branch
      %71 = sbr.rel (0) target = $region29
    $region28: #{tpu_custom_call.1} parent=1 // pred_region
      _
    $region29: #{tpu_custom_call.1} parent=1 // pred_fallthru
      _
    // Predicated region
    $region30: #{tpu_custom_call.1} parent=1 // pred_check
      _
    $region31: #{tpu_custom_call.1} parent=1 // pred_check_branch
      %73 = sbr.rel (0) target = $region33
    $region32: #{tpu_custom_call.1} parent=1 // pred_region
      %s75 = ssub.s32 1024, 1024
      %76 = vsyncadd [#allocation9], %s75
      %s77 = sshll.u32 [#allocation10], 4
      %s78 = int_to_ptr.vmem [resolvable:$true] %s77
      %83 = dma.hbm_to_vmem [thread:$0]  %s7, 1024, %s78, [#allocation9], 64, 64, 4
    $region33: #{tpu_custom_call.1} parent=1 // pred_fallthru
      _
    // Predicated region
    $region34: #{tpu_custom_call.1} parent=1 // pred_check
      _
    $region35: #{tpu_custom_call.1} parent=1 // pred_check_branch
      %85 = sbr.rel (0) target = $region37
    $region36: #{tpu_custom_call.1} parent=1 // pred_region
      _
    $region37: #{tpu_custom_call.1} parent=1 // pred_fallthru
      _
    // Predicated region
    $region38: #{tpu_custom_call.1} parent=1 // pred_check
      _
    $region39: #{tpu_custom_call.1} parent=1 // pred_check_branch
      %87 = sbr.rel (0) target = $region41
    $region40: #{tpu_custom_call.1} parent=1 // pred_region
      %88 = dma.done [#allocation3], 128
    $region41: #{tpu_custom_call.1} parent=1 // pred_fallthru
      _
    // Predicated region
    $region42: #{tpu_custom_call.1} parent=1 // pred_check
      _
    $region43: #{tpu_custom_call.1} parent=1 // pred_check_branch
      %90 = sbr.rel (0) target = $region45
    $region44: #{tpu_custom_call.1} parent=1 // pred_region
      %91 = dma.done [#allocation6], 1024
    $region45: #{tpu_custom_call.1} parent=1 // pred_fallthru
      _
    // Predicated region
    $region46: #{tpu_custom_call.1} parent=1 // pred_check
      _
    $region47: #{tpu_custom_call.1} parent=1 // pred_check_branch
      %93 = sbr.rel (0) target = $region49
    $region48: #{tpu_custom_call.1} parent=1 // pred_region
      %94 = dma.done [#allocation6], 1024
    $region49: #{tpu_custom_call.1} parent=1 // pred_fallthru
      _
    // Predicated region
    $region50: #{tpu_custom_call.1} parent=1 // pred_check
      _
    $region51: #{tpu_custom_call.1} parent=1 // pred_check_branch
      %96 = sbr.rel (0) target = $region53
    $region52: #{tpu_custom_call.1} parent=1 // pred_region
      %97 = dma.done [#allocation9], 4096
    $region53: #{tpu_custom_call.1} parent=1 // pred_fallthru
      _
    // Predicated region
    $region54: #{tpu_custom_call.1} parent=1 // pred_check
      _
    $region55: #{tpu_custom_call.1} parent=1 // pred_check_branch
      %99 = sbr.rel (0) target = $region57
    $region56: #{tpu_custom_call.1} parent=1 // pred_region
      %100 = dma.done [#allocation9], 1024
    $region57: #{tpu_custom_call.1} parent=1 // pred_fallthru
      _
    %v102 = vld [vmem:[#allocation2] sm:$0xf]
    %v103 = vld [vmem:[#allocation2 + $0x4] sm:$0xf]
    %v104 = vld [vmem:[#allocation5] sm:$0xf]
    %v105 = vld [vmem:[#allocation5 + $0x4] sm:$0xf]
    %v106 = vld [vmem:[#allocation5 + $0x8] sm:$0xf]
    %v107 = vld [vmem:[#allocation5 + $0xc] sm:$0xf]
    %v108 = vld [vmem:[#allocation5 + $0x10] sm:$0xf]
    %v109 = vld [vmem:[#allocation5 + $0x14] sm:$0xf]
    %v110 = vld [vmem:[#allocation5 + $0x18] sm:$0xf]
    %v111 = vld [vmem:[#allocation5 + $0x1c] sm:$0xf]
    %v112 = vld [vmem:[#allocation5 + $0x20] sm:$0xf]
    %v113 = vld [vmem:[#allocation5 + $0x24] sm:$0xf]
    %v114 = vld [vmem:[#allocation5 + $0x28] sm:$0xf]
    %v115 = vld [vmem:[#allocation5 + $0x2c] sm:$0xf]
    %v116 = vld [vmem:[#allocation5 + $0x30] sm:$0xf]
    %v117 = vld [vmem:[#allocation5 + $0x34] sm:$0xf]
    %v118 = vld [vmem:[#allocation5 + $0x38] sm:$0xf]
    %v119 = vld [vmem:[#allocation5 + $0x3c] sm:$0xf]
    %v120 = vld [vmem:[%s2] sm:$0x1]
    %v122 = vlaneseq
    %v123 = vshrl.u32 %v122, 7
    %v124 = vsub.s32 0, %v123
    %v125 = vrot.slane %v120, %v124
    %v129 = vunpack.c.l.b16 %v102
    %v130 = vunpack.c.l.b16 %v103
    %v131 = vpack.c.b16 %v130, %v129
    %v149 = vunpack.c.l.b16 %v104
    %v150 = vunpack.c.l.b16 %v105
    %v151 = vunpack.c.l.b16 %v106
    %v152 = vunpack.c.l.b16 %v107
    %v153 = vunpack.c.l.b16 %v108
    %v154 = vunpack.c.l.b16 %v109
    %v155 = vunpack.c.l.b16 %v110
    %v156 = vunpack.c.l.b16 %v111
    %v157 = vunpack.c.l.b16 %v112
    %v158 = vunpack.c.l.b16 %v113
    %v159 = vunpack.c.l.b16 %v114
    %v160 = vunpack.c.l.b16 %v115
    %v161 = vunpack.c.l.b16 %v116
    %v162 = vunpack.c.l.b16 %v117
    %v163 = vunpack.c.l.b16 %v118
    %v164 = vunpack.c.l.b16 %v119
    %v165 = vpack.c.b16 %v150, %v149
    %v166 = vpack.c.b16 %v152, %v151
    %v167 = vpack.c.b16 %v154, %v153
    %v168 = vpack.c.b16 %v156, %v155
    %v169 = vpack.c.b16 %v158, %v157
    %v170 = vpack.c.b16 %v160, %v159
    %v171 = vpack.c.b16 %v162, %v161
    %v172 = vpack.c.b16 %v164, %v163
    %181 = vmatprep.subr.bf16.mxu0 0
    %182 = vmatpush1.bf16.msra.mxu0 %v165
    %183 = vmatprep.subr.bf16.mxu0 0
    %184 = vmatpush1.bf16.msra.mxu0 %v166
    %185 = vmatprep.subr.bf16.mxu0 0
    %186 = vmatpush1.bf16.msra.mxu0 %v167
    %187 = vmatprep.subr.bf16.mxu0 0
    %188 = vmatpush1.bf16.msra.mxu0 %v168
    %189 = vmatprep.subr.bf16.mxu0 0
    %190 = vmatpush1.bf16.msra.mxu0 %v169
    %191 = vmatprep.subr.bf16.mxu0 0
    %192 = vmatpush1.bf16.msra.mxu0 %v170
    %193 = vmatprep.subr.bf16.mxu0 0
    %194 = vmatpush1.bf16.msra.mxu0 %v171
    %195 = vmatprep.subr.bf16.mxu0 0
    %196 = vmatpush1.bf16.msra.mxu0 %v172
    %197 = vmatprep.subr.bf16.mxu0 0
    %198 = vmatpush1.bf16.msra.mxu0 0
    %199 = vmatprep.subr.bf16.mxu0 0
    %200 = vmatpush1.bf16.msra.mxu0 0
    %201 = vmatprep.subr.bf16.mxu0 0
    %202 = vmatpush1.bf16.msra.mxu0 0
    %203 = vmatprep.subr.bf16.mxu0 0
    %204 = vmatpush1.bf16.msra.mxu0 0
    %205 = vmatprep.subr.bf16.mxu0 0
    %206 = vmatpush1.bf16.msra.mxu0 0
    %207 = vmatprep.subr.bf16.mxu0 0
    %208 = vmatpush1.bf16.msra.mxu0 0
    %209 = vmatprep.subr.bf16.mxu0 0
    %210 = vmatpush1.bf16.msra.mxu0 0
    %211 = vmatprep.subr.bf16.mxu0 0
    %212 = vmatpush1.bf16.msra.mxu0 0
    %213 = vmatprep.mubr.bf16.mxu0 0
    %214 = vmatmul.mubr.bf16.gmra.mrb[0].mxu0 %v131
    %v215 = vpop.f32.mrb[0].mxu0
    %v216 = vadd.f32 %v125, %v215
    %v217 = vpop.f32.mrb[0].mxu0
    %v218 = vpop.f32.mrb[0].mxu0
    %v219 = vadd.f32 %v125, %v218
    %v220 = vpop.f32.mrb[0].mxu0
    %221 = vdwg.mxu0
    %v222 = vmax.f32 %v216, 0.0
    %v223 = vmax.f32 %v219, 0.0
    %v224 = vpack.c.bf16 %v223, %v222
    %v225 = vld [vmem:[#allocation7] sm:$0xf]
    %v226 = vld [vmem:[#allocation7 + $0x4] sm:$0xf]
    %v227 = vld [vmem:[#allocation7 + $0x8] sm:$0xf]
    %v228 = vld [vmem:[#allocation7 + $0xc] sm:$0xf]
    %v229 = vld [vmem:[#allocation7 + $0x10] sm:$0xf]
    %v230 = vld [vmem:[#allocation7 + $0x14] sm:$0xf]
    %v231 = vld [vmem:[#allocation7 + $0x18] sm:$0xf]
    %v232 = vld [vmem:[#allocation7 + $0x1c] sm:$0xf]
    %v233 = vld [vmem:[#allocation7 + $0x20] sm:$0xf]
    %v234 = vld [vmem:[#allocation7 + $0x24] sm:$0xf]
    %v235 = vld [vmem:[#allocation7 + $0x28] sm:$0xf]
    %v236 = vld [vmem:[#allocation7 + $0x2c] sm:$0xf]
    %v237 = vld [vmem:[#allocation7 + $0x30] sm:$0xf]
    %v238 = vld [vmem:[#allocation7 + $0x34] sm:$0xf]
    %v239 = vld [vmem:[#allocation7 + $0x38] sm:$0xf]
    %v240 = vld [vmem:[#allocation7 + $0x3c] sm:$0xf]
    %v241 = vld [vmem:[%s4] sm:$0x1]
    %v243 = vlaneseq
    %v244 = vshrl.u32 %v243, 7
    %v245 = vsub.s32 0, %v244
    %v246 = vrot.slane %v241, %v245
    %v264 = vunpack.c.l.b16 %v225
    %v265 = vunpack.c.l.b16 %v226
    %v266 = vunpack.c.l.b16 %v227
    %v267 = vunpack.c.l.b16 %v228
    %v268 = vunpack.c.l.b16 %v229
    %v269 = vunpack.c.l.b16 %v230
    %v270 = vunpack.c.l.b16 %v231
    %v271 = vunpack.c.l.b16 %v232
    %v272 = vunpack.c.l.b16 %v233
    %v273 = vunpack.c.l.b16 %v234
    %v274 = vunpack.c.l.b16 %v235
    %v275 = vunpack.c.l.b16 %v236
    %v276 = vunpack.c.l.b16 %v237
    %v277 = vunpack.c.l.b16 %v238
    %v278 = vunpack.c.l.b16 %v239
    %v279 = vunpack.c.l.b16 %v240
    %v280 = vpack.c.b16 %v265, %v264
    %v281 = vpack.c.b16 %v267, %v266
    %v282 = vpack.c.b16 %v269, %v268
    %v283 = vpack.c.b16 %v271, %v270
    %v284 = vpack.c.b16 %v273, %v272
    %v285 = vpack.c.b16 %v275, %v274
    %v286 = vpack.c.b16 %v277, %v276
    %v287 = vpack.c.b16 %v279, %v278
    %296 = vmatprep.subr.bf16.mxu0 0
    %297 = vmatpush1.bf16.msra.mxu0 %v280
    %298 = vmatprep.subr.bf16.mxu0 0
    %299 = vmatpush1.bf16.msra.mxu0 %v281
    %300 = vmatprep.subr.bf16.mxu0 0
    %301 = vmatpush1.bf16.msra.mxu0 %v282
    %302 = vmatprep.subr.bf16.mxu0 0
    %303 = vmatpush1.bf16.msra.mxu0 %v283
    %304 = vmatprep.subr.bf16.mxu0 0
    %305 = vmatpush1.bf16.msra.mxu0 %v284
    %306 = vmatprep.subr.bf16.mxu0 0
    %307 = vmatpush1.bf16.msra.mxu0 %v285
    %308 = vmatprep.subr.bf16.mxu0 0
    %309 = vmatpush1.bf16.msra.mxu0 %v286
    %310 = vmatprep.subr.bf16.mxu0 0
    %311 = vmatpush1.bf16.msra.mxu0 %v287
    %312 = vmatprep.subr.bf16.mxu0 0
    %313 = vmatpush1.bf16.msra.mxu0 0
    %314 = vmatprep.subr.bf16.mxu0 0
    %315 = vmatpush1.bf16.msra.mxu0 0
    %316 = vmatprep.subr.bf16.mxu0 0
    %317 = vmatpush1.bf16.msra.mxu0 0
    %318 = vmatprep.subr.bf16.mxu0 0
    %319 = vmatpush1.bf16.msra.mxu0 0
    %320 = vmatprep.subr.bf16.mxu0 0
    %321 = vmatpush1.bf16.msra.mxu0 0
    %322 = vmatprep.subr.bf16.mxu0 0
    %323 = vmatpush1.bf16.msra.mxu0 0
    %324 = vmatprep.subr.bf16.mxu0 0
    %325 = vmatpush1.bf16.msra.mxu0 0
    %326 = vmatprep.subr.bf16.mxu0 0
    %327 = vmatpush1.bf16.msra.mxu0 0
    %328 = vmatprep.mubr.bf16.mxu0 0
    %329 = vmatmul.mubr.bf16.gmra.mrb[0].mxu0 %v224
    %v330 = vpop.f32.mrb[0].mxu0
    %v331 = vadd.f32 %v246, %v330
    %v332 = vpop.f32.mrb[0].mxu0
    %v333 = vpop.f32.mrb[0].mxu0
    %v334 = vadd.f32 %v246, %v333
    %v335 = vpop.f32.mrb[0].mxu0
    %336 = vdwg.mxu0
    %337 = vmax.xlane.f32.xlu0 %v331
    %v338 = vpop.xlane.xlu0 %337
    %339 = vmax.xlane.f32.xlu0 %v334
    %v340 = vpop.xlane.xlu0 %339
    %v341 = vsub.f32 %v331, %v338
    %v342 = vsub.f32 %v334, %v340
    %v343 = vpack.c.bf16 %v342, %v341
    %v345 = vmul.bf16 %v343, 1069105081
    %v346 = vpow.bf16.pop %v345
    %v347 = vunpack.c.l.bf16 %v346
    %v348 = vunpack.c.h.bf16 %v346
    %349 = vadd.xlane.f32.xlu0 %v347
    %v350 = vpop.xlane.xlu0 %349
    %351 = vadd.xlane.f32.xlu0 %v348
    %v352 = vpop.xlane.xlu0 %351
    %v353 = vrcp.pop %v350
    %v354 = vmul.f32 1.0, %v353
    %v355 = vrcp.pop %v352
    %v356 = vmul.f32 1.0, %v355
    %v357 = vmul.f32 %v347, %v354
    %v358 = vmul.f32 %v348, %v356
    %v359 = vpack.c.bf16 %v358, %v357
    %v360 = vld [vmem:[#allocation8] sm:$0xf]
    %v361 = vld [vmem:[#allocation8 + $0x4] sm:$0xf]
    %v362 = vld [vmem:[#allocation8 + $0x8] sm:$0xf]
    %v363 = vld [vmem:[#allocation8 + $0xc] sm:$0xf]
    %v364 = vld [vmem:[#allocation8 + $0x10] sm:$0xf]
    %v365 = vld [vmem:[#allocation8 + $0x14] sm:$0xf]
    %v366 = vld [vmem:[#allocation8 + $0x18] sm:$0xf]
    %v367 = vld [vmem:[#allocation8 + $0x1c] sm:$0xf]
    %v368 = vld [vmem:[#allocation8 + $0x20] sm:$0xf]
    %v369 = vld [vmem:[#allocation8 + $0x24] sm:$0xf]
    %v370 = vld [vmem:[#allocation8 + $0x28] sm:$0xf]
    %v371 = vld [vmem:[#allocation8 + $0x2c] sm:$0xf]
    %v372 = vld [vmem:[#allocation8 + $0x30] sm:$0xf]
    %v373 = vld [vmem:[#allocation8 + $0x34] sm:$0xf]
    %v374 = vld [vmem:[#allocation8 + $0x38] sm:$0xf]
    %v375 = vld [vmem:[#allocation8 + $0x3c] sm:$0xf]
    %v376 = vld [vmem:[%s6] sm:$0x1]
    %s377 = scalar_lea.vmem [#allocation8], 64
    %v378 = vld [vmem:[%s377] sm:$0xf]
    %v379 = vld [vmem:[%s377 + $0x4] sm:$0xf]
    %v380 = vld [vmem:[%s377 + $0x8] sm:$0xf]
    %v381 = vld [vmem:[%s377 + $0xc] sm:$0xf]
    %v382 = vld [vmem:[%s377 + $0x10] sm:$0xf]
    %v383 = vld [vmem:[%s377 + $0x14] sm:$0xf]
    %v384 = vld [vmem:[%s377 + $0x18] sm:$0xf]
    %v385 = vld [vmem:[%s377 + $0x1c] sm:$0xf]
    %v386 = vld [vmem:[%s377 + $0x20] sm:$0xf]
    %v387 = vld [vmem:[%s377 + $0x24] sm:$0xf]
    %v388 = vld [vmem:[%s377 + $0x28] sm:$0xf]
    %v389 = vld [vmem:[%s377 + $0x2c] sm:$0xf]
    %v390 = vld [vmem:[%s377 + $0x30] sm:$0xf]
    %v391 = vld [vmem:[%s377 + $0x34] sm:$0xf]
    %v392 = vld [vmem:[%s377 + $0x38] sm:$0xf]
    %v393 = vld [vmem:[%s377 + $0x3c] sm:$0xf]
    %s394 = scalar_lea.vmem %s6, 1
    %v395 = vld [vmem:[%s394] sm:$0x1]
    %v397 = vlaneseq
    %v398 = vshrl.u32 %v397, 7
    %v399 = vsub.s32 0, %v398
    %v400 = vrot.slane %v376, %v399
    %v418 = vunpack.c.l.b16 %v360
    %v419 = vunpack.c.l.b16 %v361
    %v420 = vunpack.c.l.b16 %v362
    %v421 = vunpack.c.l.b16 %v363
    %v422 = vunpack.c.l.b16 %v364
    %v423 = vunpack.c.l.b16 %v365
    %v424 = vunpack.c.l.b16 %v366
    %v425 = vunpack.c.l.b16 %v367
    %v426 = vunpack.c.l.b16 %v368
    %v427 = vunpack.c.l.b16 %v369
    %v428 = vunpack.c.l.b16 %v370
    %v429 = vunpack.c.l.b16 %v371
    %v430 = vunpack.c.l.b16 %v372
    %v431 = vunpack.c.l.b16 %v373
    %v432 = vunpack.c.l.b16 %v374
    %v433 = vunpack.c.l.b16 %v375
    %v434 = vpack.c.b16 %v419, %v418
    %v435 = vpack.c.b16 %v421, %v420
    %v436 = vpack.c.b16 %v423, %v422
    %v437 = vpack.c.b16 %v425, %v424
    %v438 = vpack.c.b16 %v427, %v426
    %v439 = vpack.c.b16 %v429, %v428
    %v440 = vpack.c.b16 %v431, %v430
    %v441 = vpack.c.b16 %v433, %v432
    %450 = vmatprep.subr.bf16.mxu0 0
    %451 = vmatpush1.bf16.msra.mxu0 %v434
    %452 = vmatprep.subr.bf16.mxu0 0
    %453 = vmatpush1.bf16.msra.mxu0 %v435
    %454 = vmatprep.subr.bf16.mxu0 0
    %455 = vmatpush1.bf16.msra.mxu0 %v436
    %456 = vmatprep.subr.bf16.mxu0 0
    %457 = vmatpush1.bf16.msra.mxu0 %v437
    %458 = vmatprep.subr.bf16.mxu0 0
    %459 = vmatpush1.bf16.msra.mxu0 %v438
    %460 = vmatprep.subr.bf16.mxu0 0
    %461 = vmatpush1.bf16.msra.mxu0 %v439
    %462 = vmatprep.subr.bf16.mxu0 0
    %463 = vmatpush1.bf16.msra.mxu0 %v440
    %464 = vmatprep.subr.bf16.mxu0 0
    %465 = vmatpush1.bf16.msra.mxu0 %v441
    %466 = vmatprep.subr.bf16.mxu0 0
    %467 = vmatpush1.bf16.msra.mxu0 0
    %468 = vmatprep.subr.bf16.mxu0 0
    %469 = vmatpush1.bf16.msra.mxu0 0
    %470 = vmatprep.subr.bf16.mxu0 0
    %471 = vmatpush1.bf16.msra.mxu0 0
    %472 = vmatprep.subr.bf16.mxu0 0
    %473 = vmatpush1.bf16.msra.mxu0 0
    %474 = vmatprep.subr.bf16.mxu0 0
    %475 = vmatpush1.bf16.msra.mxu0 0
    %476 = vmatprep.subr.bf16.mxu0 0
    %477 = vmatpush1.bf16.msra.mxu0 0
    %478 = vmatprep.subr.bf16.mxu0 0
    %479 = vmatpush1.bf16.msra.mxu0 0
    %480 = vmatprep.subr.bf16.mxu0 0
    %481 = vmatpush1.bf16.msra.mxu0 0
    %482 = vmatprep.mubr.bf16.mxu0 0
    %483 = vmatmul.mubr.bf16.gmra.mrb[0].mxu0 %v359
    %v484 = vpop.f32.mrb[0].mxu0
    %v485 = vadd.f32 %v400, %v484
    %v486 = vpop.f32.mrb[0].mxu0
    %v487 = vpop.f32.mrb[0].mxu0
    %v488 = vadd.f32 %v400, %v487
    %v489 = vpop.f32.mrb[0].mxu0
    %490 = vdwg.mxu0
    %v491 = vmax.f32 %v485, 0.0
    %v492 = vmax.f32 %v488, 0.0
    %v493 = vpack.c.bf16 %v492, %v491
    %v495 = vlaneseq
    %v496 = vshrl.u32 %v495, 7
    %v497 = vsub.s32 0, %v496
    %v498 = vrot.slane %v395, %v497
    %v516 = vunpack.c.l.b16 %v378
    %v517 = vunpack.c.l.b16 %v379
    %v518 = vunpack.c.l.b16 %v380
    %v519 = vunpack.c.l.b16 %v381
    %v520 = vunpack.c.l.b16 %v382
    %v521 = vunpack.c.l.b16 %v383
    %v522 = vunpack.c.l.b16 %v384
    %v523 = vunpack.c.l.b16 %v385
    %v524 = vunpack.c.l.b16 %v386
    %v525 = vunpack.c.l.b16 %v387
    %v526 = vunpack.c.l.b16 %v388
    %v527 = vunpack.c.l.b16 %v389
    %v528 = vunpack.c.l.b16 %v390
    %v529 = vunpack.c.l.b16 %v391
    %v530 = vunpack.c.l.b16 %v392
    %v531 = vunpack.c.l.b16 %v393
    %v532 = vpack.c.b16 %v517, %v516
    %v533 = vpack.c.b16 %v519, %v518
    %v534 = vpack.c.b16 %v521, %v520
    %v535 = vpack.c.b16 %v523, %v522
    %v536 = vpack.c.b16 %v525, %v524
    %v537 = vpack.c.b16 %v527, %v526
    %v538 = vpack.c.b16 %v529, %v528
    %v539 = vpack.c.b16 %v531, %v530
    %548 = vmatprep.subr.bf16.mxu0 0
    %549 = vmatpush1.bf16.msra.mxu0 %v532
    %550 = vmatprep.subr.bf16.mxu0 0
    %551 = vmatpush1.bf16.msra.mxu0 %v533
    %552 = vmatprep.subr.bf16.mxu0 0
    %553 = vmatpush1.bf16.msra.mxu0 %v534
    %554 = vmatprep.subr.bf16.mxu0 0
    %555 = vmatpush1.bf16.msra.mxu0 %v535
    %556 = vmatprep.subr.bf16.mxu0 0
    %557 = vmatpush1.bf16.msra.mxu0 %v536
    %558 = vmatprep.subr.bf16.mxu0 0
    %559 = vmatpush1.bf16.msra.mxu0 %v537
    %560 = vmatprep.subr.bf16.mxu0 0
    %561 = vmatpush1.bf16.msra.mxu0 %v538
    %562 = vmatprep.subr.bf16.mxu0 0
    %563 = vmatpush1.bf16.msra.mxu0 %v539
    %564 = vmatprep.subr.bf16.mxu0 0
    %565 = vmatpush1.bf16.msra.mxu0 0
    %566 = vmatprep.subr.bf16.mxu0 0
    %567 = vmatpush1.bf16.msra.mxu0 0
    %568 = vmatprep.subr.bf16.mxu0 0
    %569 = vmatpush1.bf16.msra.mxu0 0
    %570 = vmatprep.subr.bf16.mxu0 0
    %571 = vmatpush1.bf16.msra.mxu0 0
    %572 = vmatprep.subr.bf16.mxu0 0
    %573 = vmatpush1.bf16.msra.mxu0 0
    %574 = vmatprep.subr.bf16.mxu0 0
    %575 = vmatpush1.bf16.msra.mxu0 0
    %576 = vmatprep.subr.bf16.mxu0 0
    %577 = vmatpush1.bf16.msra.mxu0 0
    %578 = vmatprep.subr.bf16.mxu0 0
    %579 = vmatpush1.bf16.msra.mxu0 0
    %580 = vmatprep.mubr.bf16.mxu0 0
    %581 = vmatmul.mubr.bf16.gmra.mrb[0].mxu0 %v493
    %v582 = vpop.f32.mrb[0].mxu0
    %v583 = vadd.f32 %v498, %v582
    %v584 = vpop.f32.mrb[0].mxu0
    %v585 = vpop.f32.mrb[0].mxu0
    %v586 = vadd.f32 %v498, %v585
    %v587 = vpop.f32.mrb[0].mxu0
    %588 = vdwg.mxu0
    %589 = vmax.xlane.f32.xlu0 %v583
    %v590 = vpop.xlane.xlu0 %589
    %591 = vmax.xlane.f32.xlu0 %v586
    %v592 = vpop.xlane.xlu0 %591
    %v593 = vsub.f32 %v583, %v590
    %v594 = vsub.f32 %v586, %v592
    %v595 = vpack.c.bf16 %v594, %v593
    %v597 = vmul.bf16 %v595, 1069105081
    %v598 = vpow.bf16.pop %v597
    %v599 = vunpack.c.l.bf16 %v598
    %v600 = vunpack.c.h.bf16 %v598
    %601 = vadd.xlane.f32.xlu0 %v599
    %v602 = vpop.xlane.xlu0 %601
    %603 = vadd.xlane.f32.xlu0 %v600
    %v604 = vpop.xlane.xlu0 %603
    %v605 = vrcp.pop %v602
    %v606 = vmul.f32 1.0, %v605
    %v607 = vrcp.pop %v604
    %v608 = vmul.f32 1.0, %v607
    %v609 = vmul.f32 %v599, %v606
    %v610 = vmul.f32 %v600, %v608
    %v611 = vpack.c.bf16 %v610, %v609
    %s612 = scalar_lea.vmem [#allocation8], 128
    %v613 = vld [vmem:[%s612] sm:$0xf]
    %v614 = vld [vmem:[%s612 + $0x4] sm:$0xf]
    %v615 = vld [vmem:[%s612 + $0x8] sm:$0xf]
    %v616 = vld [vmem:[%s612 + $0xc] sm:$0xf]
    %v617 = vld [vmem:[%s612 + $0x10] sm:$0xf]
    %v618 = vld [vmem:[%s612 + $0x14] sm:$0xf]
    %v619 = vld [vmem:[%s612 + $0x18] sm:$0xf]
    %v620 = vld [vmem:[%s612 + $0x1c] sm:$0xf]
    %v621 = vld [vmem:[%s612 + $0x20] sm:$0xf]
    %v622 = vld [vmem:[%s612 + $0x24] sm:$0xf]
    %v623 = vld [vmem:[%s612 + $0x28] sm:$0xf]
    %v624 = vld [vmem:[%s612 + $0x2c] sm:$0xf]
    %v625 = vld [vmem:[%s612 + $0x30] sm:$0xf]
    %v626 = vld [vmem:[%s612 + $0x34] sm:$0xf]
    %v627 = vld [vmem:[%s612 + $0x38] sm:$0xf]
    %v628 = vld [vmem:[%s612 + $0x3c] sm:$0xf]
    %s629 = scalar_lea.vmem %s6, 2
    %v630 = vld [vmem:[%s629] sm:$0x1]
    %s631 = scalar_lea.vmem [#allocation8], 192
    %v632 = vld [vmem:[%s631] sm:$0xf]
    %v633 = vld [vmem:[%s631 + $0x4] sm:$0xf]
    %v634 = vld [vmem:[%s631 + $0x8] sm:$0xf]
    %v635 = vld [vmem:[%s631 + $0xc] sm:$0xf]
    %v636 = vld [vmem:[%s631 + $0x10] sm:$0xf]
    %v637 = vld [vmem:[%s631 + $0x14] sm:$0xf]
    %v638 = vld [vmem:[%s631 + $0x18] sm:$0xf]
    %v639 = vld [vmem:[%s631 + $0x1c] sm:$0xf]
    %v640 = vld [vmem:[%s631 + $0x20] sm:$0xf]
    %v641 = vld [vmem:[%s631 + $0x24] sm:$0xf]
    %v642 = vld [vmem:[%s631 + $0x28] sm:$0xf]
    %v643 = vld [vmem:[%s631 + $0x2c] sm:$0xf]
    %v644 = vld [vmem:[%s631 + $0x30] sm:$0xf]
    %v645 = vld [vmem:[%s631 + $0x34] sm:$0xf]
    %v646 = vld [vmem:[%s631 + $0x38] sm:$0xf]
    %v647 = vld [vmem:[%s631 + $0x3c] sm:$0xf]
    %s648 = scalar_lea.vmem %s6, 3
    %v649 = vld [vmem:[%s648] sm:$0x1]
    %v651 = vlaneseq
    %v652 = vshrl.u32 %v651, 7
    %v653 = vsub.s32 0, %v652
    %v654 = vrot.slane %v630, %v653
    %v672 = vunpack.c.l.b16 %v613
    %v673 = vunpack.c.l.b16 %v614
    %v674 = vunpack.c.l.b16 %v615
    %v675 = vunpack.c.l.b16 %v616
    %v676 = vunpack.c.l.b16 %v617
    %v677 = vunpack.c.l.b16 %v618
    %v678 = vunpack.c.l.b16 %v619
    %v679 = vunpack.c.l.b16 %v620
    %v680 = vunpack.c.l.b16 %v621
    %v681 = vunpack.c.l.b16 %v622
    %v682 = vunpack.c.l.b16 %v623
    %v683 = vunpack.c.l.b16 %v624
    %v684 = vunpack.c.l.b16 %v625
    %v685 = vunpack.c.l.b16 %v626
    %v686 = vunpack.c.l.b16 %v627
    %v687 = vunpack.c.l.b16 %v628
    %v688 = vpack.c.b16 %v673, %v672
    %v689 = vpack.c.b16 %v675, %v674
    %v690 = vpack.c.b16 %v677, %v676
    %v691 = vpack.c.b16 %v679, %v678
    %v692 = vpack.c.b16 %v681, %v680
    %v693 = vpack.c.b16 %v683, %v682
    %v694 = vpack.c.b16 %v685, %v684
    %v695 = vpack.c.b16 %v687, %v686
    %704 = vmatprep.subr.bf16.mxu0 0
    %705 = vmatpush1.bf16.msra.mxu0 %v688
    %706 = vmatprep.subr.bf16.mxu0 0
    %707 = vmatpush1.bf16.msra.mxu0 %v689
    %708 = vmatprep.subr.bf16.mxu0 0
    %709 = vmatpush1.bf16.msra.mxu0 %v690
    %710 = vmatprep.subr.bf16.mxu0 0
    %711 = vmatpush1.bf16.msra.mxu0 %v691
    %712 = vmatprep.subr.bf16.mxu0 0
    %713 = vmatpush1.bf16.msra.mxu0 %v692
    %714 = vmatprep.subr.bf16.mxu0 0
    %715 = vmatpush1.bf16.msra.mxu0 %v693
    %716 = vmatprep.subr.bf16.mxu0 0
    %717 = vmatpush1.bf16.msra.mxu0 %v694
    %718 = vmatprep.subr.bf16.mxu0 0
    %719 = vmatpush1.bf16.msra.mxu0 %v695
    %720 = vmatprep.subr.bf16.mxu0 0
    %721 = vmatpush1.bf16.msra.mxu0 0
    %722 = vmatprep.subr.bf16.mxu0 0
    %723 = vmatpush1.bf16.msra.mxu0 0
    %724 = vmatprep.subr.bf16.mxu0 0
    %725 = vmatpush1.bf16.msra.mxu0 0
    %726 = vmatprep.subr.bf16.mxu0 0
    %727 = vmatpush1.bf16.msra.mxu0 0
    %728 = vmatprep.subr.bf16.mxu0 0
    %729 = vmatpush1.bf16.msra.mxu0 0
    %730 = vmatprep.subr.bf16.mxu0 0
    %731 = vmatpush1.bf16.msra.mxu0 0
    %732 = vmatprep.subr.bf16.mxu0 0
    %733 = vmatpush1.bf16.msra.mxu0 0
    %734 = vmatprep.subr.bf16.mxu0 0
    %735 = vmatpush1.bf16.msra.mxu0 0
    %736 = vmatprep.mubr.bf16.mxu0 0
    %737 = vmatmul.mubr.bf16.gmra.mrb[0].mxu0 %v611
    %v738 = vpop.f32.mrb[0].mxu0
    %v739 = vadd.f32 %v654, %v738
    %v740 = vpop.f32.mrb[0].mxu0
    %v741 = vpop.f32.mrb[0].mxu0
    %v742 = vadd.f32 %v654, %v741
    %v743 = vpop.f32.mrb[0].mxu0
    %744 = vdwg.mxu0
    %v745 = vmax.f32 %v739, 0.0
    %v746 = vmax.f32 %v742, 0.0
    %v747 = vpack.c.bf16 %v746, %v745
    %v749 = vlaneseq
    %v750 = vshrl.u32 %v749, 7
    %v751 = vsub.s32 0, %v750
    %v752 = vrot.slane %v649, %v751
    %v770 = vunpack.c.l.b16 %v632
    %v771 = vunpack.c.l.b16 %v633
    %v772 = vunpack.c.l.b16 %v634
    %v773 = vunpack.c.l.b16 %v635
    %v774 = vunpack.c.l.b16 %v636
    %v775 = vunpack.c.l.b16 %v637
    %v776 = vunpack.c.l.b16 %v638
    %v777 = vunpack.c.l.b16 %v639
    %v778 = vunpack.c.l.b16 %v640
    %v779 = vunpack.c.l.b16 %v641
    %v780 = vunpack.c.l.b16 %v642
    %v781 = vunpack.c.l.b16 %v643
    %v782 = vunpack.c.l.b16 %v644
    %v783 = vunpack.c.l.b16 %v645
    %v784 = vunpack.c.l.b16 %v646
    %v785 = vunpack.c.l.b16 %v647
    %v786 = vpack.c.b16 %v771, %v770
    %v787 = vpack.c.b16 %v773, %v772
    %v788 = vpack.c.b16 %v775, %v774
    %v789 = vpack.c.b16 %v777, %v776
    %v790 = vpack.c.b16 %v779, %v778
    %v791 = vpack.c.b16 %v781, %v780
    %v792 = vpack.c.b16 %v783, %v782
    %v793 = vpack.c.b16 %v785, %v784
    %802 = vmatprep.subr.bf16.mxu0 0
    %803 = vmatpush1.bf16.msra.mxu0 %v786
    %804 = vmatprep.subr.bf16.mxu0 0
    %805 = vmatpush1.bf16.msra.mxu0 %v787
    %806 = vmatprep.subr.bf16.mxu0 0
    %807 = vmatpush1.bf16.msra.mxu0 %v788
    %808 = vmatprep.subr.bf16.mxu0 0
    %809 = vmatpush1.bf16.msra.mxu0 %v789
    %810 = vmatprep.subr.bf16.mxu0 0
    %811 = vmatpush1.bf16.msra.mxu0 %v790
    %812 = vmatprep.subr.bf16.mxu0 0
    %813 = vmatpush1.bf16.msra.mxu0 %v791
    %814 = vmatprep.subr.bf16.mxu0 0
    %815 = vmatpush1.bf16.msra.mxu0 %v792
    %816 = vmatprep.subr.bf16.mxu0 0
    %817 = vmatpush1.bf16.msra.mxu0 %v793
    %818 = vmatprep.subr.bf16.mxu0 0
    %819 = vmatpush1.bf16.msra.mxu0 0
    %820 = vmatprep.subr.bf16.mxu0 0
    %821 = vmatpush1.bf16.msra.mxu0 0
    %822 = vmatprep.subr.bf16.mxu0 0
    %823 = vmatpush1.bf16.msra.mxu0 0
    %824 = vmatprep.subr.bf16.mxu0 0
    %825 = vmatpush1.bf16.msra.mxu0 0
    %826 = vmatprep.subr.bf16.mxu0 0
    %827 = vmatpush1.bf16.msra.mxu0 0
    %828 = vmatprep.subr.bf16.mxu0 0
    %829 = vmatpush1.bf16.msra.mxu0 0
    %830 = vmatprep.subr.bf16.mxu0 0
    %831 = vmatpush1.bf16.msra.mxu0 0
    %832 = vmatprep.subr.bf16.mxu0 0
    %833 = vmatpush1.bf16.msra.mxu0 0
    %834 = vmatprep.mubr.bf16.mxu0 0
    %835 = vmatmul.mubr.bf16.gmra.mrb[0].mxu0 %v747
    %v836 = vpop.f32.mrb[0].mxu0
    %v837 = vadd.f32 %v752, %v836
    %v838 = vpop.f32.mrb[0].mxu0
    %v839 = vpop.f32.mrb[0].mxu0
    %v840 = vadd.f32 %v752, %v839
    %v841 = vpop.f32.mrb[0].mxu0
    %842 = vdwg.mxu0
    %843 = vmax.xlane.f32.xlu0 %v837
    %v844 = vpop.xlane.xlu0 %843
    %845 = vmax.xlane.f32.xlu0 %v840
    %v846 = vpop.xlane.xlu0 %845
    %v847 = vsub.f32 %v837, %v844
    %v848 = vsub.f32 %v840, %v846
    %v849 = vpack.c.bf16 %v848, %v847
    %v851 = vmul.bf16 %v849, 1069105081
    %v852 = vpow.bf16.pop %v851
    %v853 = vunpack.c.l.bf16 %v852
    %v854 = vunpack.c.h.bf16 %v852
    %855 = vadd.xlane.f32.xlu0 %v853
    %v856 = vpop.xlane.xlu0 %855
    %857 = vadd.xlane.f32.xlu0 %v854
    %v858 = vpop.xlane.xlu0 %857
    %v859 = vrcp.pop %v856
    %v860 = vmul.f32 1.0, %v859
    %v861 = vrcp.pop %v858
    %v862 = vmul.f32 1.0, %v861
    %v863 = vmul.f32 %v853, %v860
    %v864 = vmul.f32 %v854, %v862
    %v865 = vpack.c.bf16 %v864, %v863
    %v866 = vld [vmem:[#allocation10] sm:$0xf]
    %v867 = vld [vmem:[#allocation10 + $0x4] sm:$0xf]
    %v868 = vld [vmem:[#allocation10 + $0x8] sm:$0xf]
    %v869 = vld [vmem:[#allocation10 + $0xc] sm:$0xf]
    %v870 = vld [vmem:[#allocation10 + $0x10] sm:$0xf]
    %v871 = vld [vmem:[#allocation10 + $0x14] sm:$0xf]
    %v872 = vld [vmem:[#allocation10 + $0x18] sm:$0xf]
    %v873 = vld [vmem:[#allocation10 + $0x1c] sm:$0xf]
    %v874 = vld [vmem:[#allocation10 + $0x20] sm:$0xf]
    %v875 = vld [vmem:[#allocation10 + $0x24] sm:$0xf]
    %v876 = vld [vmem:[#allocation10 + $0x28] sm:$0xf]
    %v877 = vld [vmem:[#allocation10 + $0x2c] sm:$0xf]
    %v878 = vld [vmem:[#allocation10 + $0x30] sm:$0xf]
    %v879 = vld [vmem:[#allocation10 + $0x34] sm:$0xf]
    %v880 = vld [vmem:[#allocation10 + $0x38] sm:$0xf]
    %v881 = vld [vmem:[#allocation10 + $0x3c] sm:$0xf]
    %v882 = vld [vmem:[%s8] sm:$0x1]
    %v884 = vlaneseq
    %v885 = vshrl.u32 %v884, 7
    %v886 = vsub.s32 0, %v885
    %v887 = vrot.slane %v882, %v886
    %v905 = vunpack.c.l.b16 %v866
    %v906 = vunpack.c.l.b16 %v867
    %v907 = vunpack.c.l.b16 %v868
    %v908 = vunpack.c.l.b16 %v869
    %v909 = vunpack.c.l.b16 %v870
    %v910 = vunpack.c.l.b16 %v871
    %v911 = vunpack.c.l.b16 %v872
    %v912 = vunpack.c.l.b16 %v873
    %v913 = vunpack.c.l.b16 %v874
    %v914 = vunpack.c.l.b16 %v875
    %v915 = vunpack.c.l.b16 %v876
    %v916 = vunpack.c.l.b16 %v877
    %v917 = vunpack.c.l.b16 %v878
    %v918 = vunpack.c.l.b16 %v879
    %v919 = vunpack.c.l.b16 %v880
    %v920 = vunpack.c.l.b16 %v881
    %v921 = vpack.c.b16 %v906, %v905
    %v922 = vpack.c.b16 %v908, %v907
    %v923 = vpack.c.b16 %v910, %v909
    %v924 = vpack.c.b16 %v912, %v911
    %v925 = vpack.c.b16 %v914, %v913
    %v926 = vpack.c.b16 %v916, %v915
    %v927 = vpack.c.b16 %v918, %v917
    %v928 = vpack.c.b16 %v920, %v919
    %937 = vmatprep.subr.bf16.mxu0 0
    %938 = vmatpush1.bf16.msra.mxu0 %v921
    %939 = vmatprep.subr.bf16.mxu0 0
    %940 = vmatpush1.bf16.msra.mxu0 %v922
    %941 = vmatprep.subr.bf16.mxu0 0
    %942 = vmatpush1.bf16.msra.mxu0 %v923
    %943 = vmatprep.subr.bf16.mxu0 0
    %944 = vmatpush1.bf16.msra.mxu0 %v924
    %945 = vmatprep.subr.bf16.mxu0 0
    %946 = vmatpush1.bf16.msra.mxu0 %v925
    %947 = vmatprep.subr.bf16.mxu0 0
    %948 = vmatpush1.bf16.msra.mxu0 %v926
    %949 = vmatprep.subr.bf16.mxu0 0
    %950 = vmatpush1.bf16.msra.mxu0 %v927
    %951 = vmatprep.subr.bf16.mxu0 0
    %952 = vmatpush1.bf16.msra.mxu0 %v928
    %953 = vmatprep.subr.bf16.mxu0 0
    %954 = vmatpush1.bf16.msra.mxu0 0
    %955 = vmatprep.subr.bf16.mxu0 0
    %956 = vmatpush1.bf16.msra.mxu0 0
    %957 = vmatprep.subr.bf16.mxu0 0
    %958 = vmatpush1.bf16.msra.mxu0 0
    %959 = vmatprep.subr.bf16.mxu0 0
    %960 = vmatpush1.bf16.msra.mxu0 0
    %961 = vmatprep.subr.bf16.mxu0 0
    %962 = vmatpush1.bf16.msra.mxu0 0
    %963 = vmatprep.subr.bf16.mxu0 0
    %964 = vmatpush1.bf16.msra.mxu0 0
    %965 = vmatprep.subr.bf16.mxu0 0
    %966 = vmatpush1.bf16.msra.mxu0 0
    %967 = vmatprep.subr.bf16.mxu0 0
    %968 = vmatpush1.bf16.msra.mxu0 0
    %969 = vmatprep.mubr.bf16.mxu0 0
    %970 = vmatmul.mubr.bf16.gmra.mrb[0].mxu0 %v865
    %v971 = vpop.f32.mrb[0].mxu0
    %v972 = vadd.f32 %v887, %v971
    %v973 = vpop.f32.mrb[0].mxu0
    %v974 = vpop.f32.mrb[0].mxu0
    %v975 = vadd.f32 %v887, %v974
    %v976 = vpop.f32.mrb[0].mxu0
    %977 = vdwg.mxu0
    %978 = vst [vmem:[#allocation11] sm:$0xff] %v972
    %979 = vst [vmem:[#allocation11 + $0x8] sm:$0xff] %v975
    // Predicated region
    $region58: #{tpu_custom_call.1} parent=1 // pred_check
      _
    $region59: #{tpu_custom_call.1} parent=1 // pred_check_branch
      %981 = sbr.rel (0) target = $region61
    $region60: #{tpu_custom_call.1} parent=1 // pred_region
      %s983 = ssub.s32 256, 256
      %984 = vsyncadd [#allocation4], %s983
      %s985 = sshll.u32 [#allocation11], 4
      %s986 = int_to_ptr.vmem [resolvable:$true] %s985
      %991 = dma.vmem_to_hbm [thread:$0]  %s986, 256, %s9, [#allocation4], 128, 128, 8
    $region61: #{tpu_custom_call.1} parent=1 // pred_fallthru
      _
    // Predicated region
    $region62: #{tpu_custom_call.1} parent=1 // pred_check
      _
    $region63: #{tpu_custom_call.1} parent=1 // pred_check_branch
      %993 = sbr.rel (0) target = $region65
    $region64: #{tpu_custom_call.1} parent=1 // pred_region
      %994 = dma.done [#allocation4], 256
    $region65: #{tpu_custom_call.1} parent=1 // pred_fallthru
      _
    %995 = vsyncpa [#allocation3], 1
    %996 = vsyncpa [#allocation6], 1
    %997 = vsyncpa [#allocation9], 1
    %998 = vsyncpa [#allocation4], 1

</llo_original>
